<compile_context>
chip_gen: v5e
topology: v5e:2x2
jax: 0.10.0
libtpu: 0.0.40
codegen_flags: <defaults>
</compile_context>

<pallas_src>
import functools

import jax
import jax.numpy as jnp
import numpy as np
from jax import lax
from jax.experimental import pallas as pl
from jax.experimental.pallas import tpu as pltpu


def _mhsa_kernel(xq_ref, xk_ref, xv_ref, wq_ref, wk_ref, wv_ref, b_ref, o_ref,
                 *, n_head, n_hidden, seq_len, batches_per_block,
                 use_bf16_matmul):
    H, D, S = n_head, n_hidden, seq_len

    xq = xq_ref[...]            # (R, n_query), R = batches_per_block * S
    xk = xk_ref[...]            # (R, n_key)
    xv = xv_ref[...]            # (R, n_value)
    b_all = b_ref[...]          # (3*H, D) packed biases (q rows, then k, then v)

    # Per-head projections with wrapper-stacked weights: qh/kh/vh are produced
    # directly at (R, D), so no sub-vreg lane slices of a fused (R, H*D) tensor
    # are ever needed.  1/sqrt(D) is already folded into wq / bq.
    q_heads, k_heads, v_heads = [], [], []
    for h in range(H):
        q_heads.append(jnp.dot(xq, wq_ref[h], preferred_element_type=jnp.float32)
                       + b_all[h:h + 1, :])
        k_heads.append(jnp.dot(xk, wk_ref[h], preferred_element_type=jnp.float32)
                       + b_all[H + h:H + h + 1, :])
        v_heads.append(jnp.dot(xv, wv_ref[h], preferred_element_type=jnp.float32)
                       + b_all[2 * H + h:2 * H + h + 1, :])

    out_row_blocks = []
    for b in range(batches_per_block):          # static; rows sliced at b*S
        lo = b * S                              # multiple of 8 -> sublane-aligned
        head_outs = []
        for h in range(H):
            qh = q_heads[h][lo:lo + S, :]       # (S, D) free row view
            kh = k_heads[h][lo:lo + S, :]
            vh = v_heads[h][lo:lo + S, :]
            if use_bf16_matmul:                 # MXU is bf16-native; keep f32 acc
                qh, kh = qh.astype(jnp.bfloat16), kh.astype(jnp.bfloat16)

            # scores[i, j] = sum_d qh[i, d] * kh[j, d] -- contract last dims,
            # no explicit transpose (MXU handles the orientation).
            scores = lax.dot_general(
                qh, kh, (((1,), (1,)), ((), ())),
                preferred_element_type=jnp.float32)          # (S, S)

            # Softmax over the key axis (dim=2 of the PyTorch module).
            m = jnp.max(scores, axis=-1, keepdims=True)
            p = jnp.exp(scores - m)
            l = jnp.sum(p, axis=-1, keepdims=True)           # (S, 1)

            if use_bf16_matmul:
                p = p.astype(jnp.bfloat16)
                vh = vh.astype(jnp.bfloat16)
            o = jnp.dot(p, vh, preferred_element_type=jnp.float32)   # (S, D)
            # Normalise AFTER the AV matmul (online-softmax form); exact f32
            # divide on the (S, 1) column restores full accuracy vs. the old
            # approximate reciprocal.
            head_outs.append(o / l)

        # Head concat along lanes: at D % 128 == 0 this is a free vreg-aligned
        # pack; at D = 32 it is the minimum lane packing the (B, S, H*D)
        # output layout requires.
        out_row_blocks.append(jnp.concatenate(head_outs, axis=-1))   # (S, H*D)

    out = jnp.concatenate(out_row_blocks, axis=0)                    # (R, H*D)
    o_ref[...] = out.astype(o_ref.dtype)


def prepare_mhsa_params(params, n_head, n_hidden):
    """One-time prep of PyTorch-style Linear params into kernel-ready arrays.

    Hoisted out of the forward so repeated calls do not pay the transpose /
    scale / pack every time.
    """
    H, D = n_head, n_hidden
    inv_temperature = 1.0 / float(np.power(D, 0.5))

    def stack_per_head(w):                      # (H*D, n_in) -> (H, n_in, D)
        n_in = w.shape[1]
        return jnp.transpose(jnp.reshape(w, (H, D, n_in)), (0, 2, 1))

    # y = x @ W.T + b, per head.  Fold 1/sqrt(D) into the query projection so
    # the kernel never scales the (S, S) scores.
    wq = stack_per_head(params["wq"]) * inv_temperature     # (H, n_query, D)
    wk = stack_per_head(params["wk"])                       # (H, n_key,   D)
    wv = stack_per_head(params["wv"])                       # (H, n_value, D)
    b_all = jnp.concatenate(
        [jnp.reshape(params["bq"], (H, D)) * inv_temperature,
         jnp.reshape(params["bk"], (H, D)),
         jnp.reshape(params["bv"], (H, D))], axis=0)         # (3*H, D)
    return {"wq": wq, "wk": wk, "wv": wv, "b": b_all}


def naive_mhsa_pallas(input_query, input_key, input_value, prepped, *,
                      n_head, n_hidden, num_grid_blocks=1,
                      use_bf16_matmul=False):
    """Pallas forward of NaiveMultiHeadSelfAttention.

    input_query : (B, S, n_query)
    input_key   : (B, S, n_key)
    input_value : (B, S, n_value)
    prepped     : output of prepare_mhsa_params
    num_grid_blocks: 1 on v5e/v6e (single TensorCore, per-step overhead is
        pure loss); 2 on v7x so both TensorCores get a "parallel" block.
    returns: (B, S, n_head*n_hidden)
    """
    B, S, n_query = input_query.shape
    n_key = input_key.shape[-1]
    n_value = input_value.shape[-1]
    H, D = n_head, n_hidden
    HD = H * D

    assert B % num_grid_blocks == 0
    batches_per_block = B // num_grid_blocks
    R = batches_per_block * S                   # rows handled per grid step

    # Free, contiguity-preserving reshapes: fold B into the matmul M dim.
    xq = jnp.reshape(input_query, (B * S, n_query))
    xk = jnp.reshape(input_key, (B * S, n_key))
    xv = jnp.reshape(input_value, (B * S, n_value))

    kernel = functools.partial(
        _mhsa_kernel, n_head=H, n_hidden=D, seq_len=S,
        batches_per_block=batches_per_block, use_bf16_matmul=use_bf16_matmul)

    out = pl.pallas_call(
        kernel,
        out_shape=jax.ShapeDtypeStruct((B * S, HD), input_query.dtype),
        grid_spec=pltpu.PrefetchScalarGridSpec(
            num_scalar_prefetch=0,
            grid=(num_grid_blocks,),
            in_specs=[
                pl.BlockSpec((R, n_query), lambda i: (i, 0)),
                pl.BlockSpec((R, n_key), lambda i: (i, 0)),
                pl.BlockSpec((R, n_value), lambda i: (i, 0)),
                # Weights / packed biases: block-index-constant index_maps ->
                # DMA'd once and kept resident across the grid.
                pl.BlockSpec((H, n_query, D), lambda i: (0, 0, 0)),
                pl.BlockSpec((H, n_key, D), lambda i: (0, 0, 0)),
                pl.BlockSpec((H, n_value, D), lambda i: (0, 0, 0)),
                pl.BlockSpec((3 * H, D), lambda i: (0, 0)),
            ],
            out_specs=pl.BlockSpec((R, HD), lambda i: (i, 0)),
        ),
        compiler_params=pltpu.CompilerParams(
            dimension_semantics=("parallel",)),
    )(xq, xk, xv, prepped["wq"], prepped["wk"], prepped["wv"], prepped["b"])

    return jnp.reshape(out, (B, S, HD))         # free reshape of contiguous out


def _reference_mhsa(xq, xk, xv, params, n_head, n_hidden):
    """Pure-JAX mirror of the PyTorch forward, for correctness checking."""
    B, S, _ = xq.shape
    H, D = n_head, n_hidden
    hp = lax.Precision.HIGHEST
    q = jnp.einsum("bsi,oi->bso", xq, params["wq"], precision=hp) + params["bq"]
    k = jnp.einsum("bsi,oi->bso", xk, params["wk"], precision=hp) + params["bk"]
    v = jnp.einsum("bsi,oi->bso", xv, params["wv"], precision=hp) + params["bv"]
    q = q.reshape(B, S, H, D).transpose(2, 0, 1, 3).reshape(H * B, S, D)
    k = k.reshape(B, S, H, D).transpose(2, 0, 1, 3).reshape(H * B, S, D)
    v = v.reshape(B, S, H, D).transpose(2, 0, 1, 3).reshape(H * B, S, D)
    scores = jnp.einsum("bqd,bkd->bqk", q, k, precision=hp) / np.power(D, 0.5)
    attn = jax.nn.softmax(scores, axis=2)
    out = jnp.einsum("bqk,bkd->bqd", attn, v, precision=hp)
    out = out.reshape(H, B, S, D).transpose(1, 2, 0, 3).reshape(B, S, H * D)
    return out


if __name__ == "__main__":
    # Small shapes consistent with the module.
    n_head, n_hidden = 2, 32
    n_query = n_key = n_value = 16
    batch, seq = 2, 8

    key = jax.random.PRNGKey(0)
    keys = jax.random.split(key, 9)

    def wstd(n_in):
        return np.sqrt(2.0 / (n_in + n_hidden))

    params = {
        "wq": jax.random.normal(keys[0], (n_head * n_hidden, n_query), jnp.float32) * wstd(n_query),
        "wk": jax.random.normal(keys[1], (n_head * n_hidden, n_key), jnp.float32) * wstd(n_key),
        "wv": jax.random.normal(keys[2], (n_head * n_hidden, n_value), jnp.float32) * wstd(n_value),
        "bq": jax.random.uniform(keys[3], (n_head * n_hidden,), jnp.float32,
                                 -1.0 / np.sqrt(n_query), 1.0 / np.sqrt(n_query)),
        "bk": jax.random.uniform(keys[4], (n_head * n_hidden,), jnp.float32,
                                 -1.0 / np.sqrt(n_key), 1.0 / np.sqrt(n_key)),
        "bv": jax.random.uniform(keys[5], (n_head * n_hidden,), jnp.float32,
                                 -1.0 / np.sqrt(n_value), 1.0 / np.sqrt(n_value)),
    }

    input_query = jax.random.normal(keys[6], (batch, seq, n_query), jnp.float32)
    input_key = jax.random.normal(keys[7], (batch, seq, n_key), jnp.float32)
    input_value = jax.random.normal(keys[8], (batch, seq, n_value), jnp.float32)

    # Weight prep hoisted out of the forward (done exactly once).
    prepped = prepare_mhsa_params(params, n_head, n_hidden)

    fwd = jax.jit(functools.partial(naive_mhsa_pallas,
                                    n_head=n_head, n_hidden=n_hidden))
    out = fwd(input_query, input_key, input_value, prepped)
    out = jax.block_until_ready(out)

    ref = _reference_mhsa(input_query, input_key, input_value, params,
                          n_head, n_hidden)
    # Exact softmax normalisation (no approx reciprocal) -> tight tolerance.
    np.testing.assert_allclose(np.asarray(out), np.asarray(ref),
                               rtol=1e-4, atol=1e-4)
    print("KERNEL_OK")
</pallas_src>

<mosaic_0001>
module attributes {stable_mosaic.version = 11 : i64} {
  func.func @_mhsa_kernel(%arg0: i32, %arg1: memref<16x16xf32, #tpu.memory_space<vmem>>, %arg2: memref<16x16xf32, #tpu.memory_space<vmem>>, %arg3: memref<16x16xf32, #tpu.memory_space<vmem>>, %arg4: memref<2x16x32xf32, #tpu.memory_space<vmem>>, %arg5: memref<2x16x32xf32, #tpu.memory_space<vmem>>, %arg6: memref<2x16x32xf32, #tpu.memory_space<vmem>>, %arg7: memref<6x32xf32, #tpu.memory_space<vmem>>, %arg8: memref<16x64xf32, #tpu.memory_space<vmem>>) attributes {dimension_semantics = [#tpu.dimension_semantics<parallel>], iteration_bounds = array<i64: 1>, scalar_prefetch = 0 : i64, scratch_operands = 0 : i64, tpu.core_type = #tpu.core_type<tc>, window_params = [{transform_indices = @transform_0, window_bounds = array<i64: 16, 16>}, {transform_indices = @transform_1, window_bounds = array<i64: 16, 16>}, {transform_indices = @transform_2, window_bounds = array<i64: 16, 16>}, {pipeline_mode = #tpu.pipeline_mode<synchronous>, transform_indices = @transform_3, window_bounds = array<i64: 2, 16, 32>}, {pipeline_mode = #tpu.pipeline_mode<synchronous>, transform_indices = @transform_4, window_bounds = array<i64: 2, 16, 32>}, {pipeline_mode = #tpu.pipeline_mode<synchronous>, transform_indices = @transform_5, window_bounds = array<i64: 2, 16, 32>}, {pipeline_mode = #tpu.pipeline_mode<synchronous>, transform_indices = @transform_6, window_bounds = array<i64: 6, 32>}, {transform_indices = @transform_7, window_bounds = array<i64: 16, 64>}]} {
    %c0 = arith.constant 0 : index
    %c0_0 = arith.constant 0 : index
    %0 = vector.load %arg1[%c0, %c0_0] : memref<16x16xf32, #tpu.memory_space<vmem>>, vector<16x16xf32>
    %c0_1 = arith.constant 0 : index
    %c0_2 = arith.constant 0 : index
    %1 = vector.load %arg2[%c0_1, %c0_2] : memref<16x16xf32, #tpu.memory_space<vmem>>, vector<16x16xf32>
    %c0_3 = arith.constant 0 : index
    %c0_4 = arith.constant 0 : index
    %2 = vector.load %arg3[%c0_3, %c0_4] : memref<16x16xf32, #tpu.memory_space<vmem>>, vector<16x16xf32>
    %c0_5 = arith.constant 0 : index
    %c0_6 = arith.constant 0 : index
    %3 = vector.load %arg7[%c0_5, %c0_6] : memref<6x32xf32, #tpu.memory_space<vmem>>, vector<6x32xf32>
    %c0_7 = arith.constant 0 : index
    %c0_8 = arith.constant 0 : index
    %c0_9 = arith.constant 0 : index
    %4 = vector.load %arg4[%c0_7, %c0_8, %c0_9] : memref<2x16x32xf32, #tpu.memory_space<vmem>>, vector<1x16x32xf32>
    %5 = vector.shape_cast %4 : vector<1x16x32xf32> to vector<16x32xf32>
    %cst = arith.constant dense<0.000000e+00> : vector<16x32xf32>
    %6 = tpu.matmul %0, %5, %cst {dimension_numbers = #tpu.dot_dimension_numbers<[1], [0], [0], [1], [0, 0, 1, 1], [], []>} : vector<16x16xf32>, vector<16x32xf32>, vector<16x32xf32> -> vector<16x32xf32>
    %7 = vector.extract_strided_slice %3 {offsets = [0, 0], sizes = [1, 32], strides = [1, 1]} : vector<6x32xf32> to vector<1x32xf32>
    %8 = vector.broadcast %7 : vector<1x32xf32> to vector<16x32xf32>
    %9 = arith.addf %6, %8 : vector<16x32xf32>
    %c0_10 = arith.constant 0 : index
    %c0_11 = arith.constant 0 : index
    %c0_12 = arith.constant 0 : index
    %10 = vector.load %arg5[%c0_10, %c0_11, %c0_12] : memref<2x16x32xf32, #tpu.memory_space<vmem>>, vector<1x16x32xf32>
    %11 = vector.shape_cast %10 : vector<1x16x32xf32> to vector<16x32xf32>
    %cst_13 = arith.constant dense<0.000000e+00> : vector<16x32xf32>
    %12 = tpu.matmul %1, %11, %cst_13 {dimension_numbers = #tpu.dot_dimension_numbers<[1], [0], [0], [1], [0, 0, 1, 1], [], []>} : vector<16x16xf32>, vector<16x32xf32>, vector<16x32xf32> -> vector<16x32xf32>
    %13 = vector.extract_strided_slice %3 {offsets = [2, 0], sizes = [1, 32], strides = [1, 1]} : vector<6x32xf32> to vector<1x32xf32>
    %14 = vector.broadcast %13 : vector<1x32xf32> to vector<16x32xf32>
    %15 = arith.addf %12, %14 : vector<16x32xf32>
    %c0_14 = arith.constant 0 : index
    %c0_15 = arith.constant 0 : index
    %c0_16 = arith.constant 0 : index
    %16 = vector.load %arg6[%c0_14, %c0_15, %c0_16] : memref<2x16x32xf32, #tpu.memory_space<vmem>>, vector<1x16x32xf32>
    %17 = vector.shape_cast %16 : vector<1x16x32xf32> to vector<16x32xf32>
    %cst_17 = arith.constant dense<0.000000e+00> : vector<16x32xf32>
    %18 = tpu.matmul %2, %17, %cst_17 {dimension_numbers = #tpu.dot_dimension_numbers<[1], [0], [0], [1], [0, 0, 1, 1], [], []>} : vector<16x16xf32>, vector<16x32xf32>, vector<16x32xf32> -> vector<16x32xf32>
    %19 = vector.extract_strided_slice %3 {offsets = [4, 0], sizes = [1, 32], strides = [1, 1]} : vector<6x32xf32> to vector<1x32xf32>
    %20 = vector.broadcast %19 : vector<1x32xf32> to vector<16x32xf32>
    %21 = arith.addf %18, %20 : vector<16x32xf32>
    %c1 = arith.constant 1 : index
    %c0_18 = arith.constant 0 : index
    %c0_19 = arith.constant 0 : index
    %22 = vector.load %arg4[%c1, %c0_18, %c0_19] : memref<2x16x32xf32, #tpu.memory_space<vmem>>, vector<1x16x32xf32>
    %23 = vector.shape_cast %22 : vector<1x16x32xf32> to vector<16x32xf32>
    %cst_20 = arith.constant dense<0.000000e+00> : vector<16x32xf32>
    %24 = tpu.matmul %0, %23, %cst_20 {dimension_numbers = #tpu.dot_dimension_numbers<[1], [0], [0], [1], [0, 0, 1, 1], [], []>} : vector<16x16xf32>, vector<16x32xf32>, vector<16x32xf32> -> vector<16x32xf32>
    %25 = vector.extract_strided_slice %3 {offsets = [1, 0], sizes = [1, 32], strides = [1, 1]} : vector<6x32xf32> to vector<1x32xf32>
    %26 = vector.broadcast %25 : vector<1x32xf32> to vector<16x32xf32>
    %27 = arith.addf %24, %26 : vector<16x32xf32>
    %c1_21 = arith.constant 1 : index
    %c0_22 = arith.constant 0 : index
    %c0_23 = arith.constant 0 : index
    %28 = vector.load %arg5[%c1_21, %c0_22, %c0_23] : memref<2x16x32xf32, #tpu.memory_space<vmem>>, vector<1x16x32xf32>
    %29 = vector.shape_cast %28 : vector<1x16x32xf32> to vector<16x32xf32>
    %cst_24 = arith.constant dense<0.000000e+00> : vector<16x32xf32>
    %30 = tpu.matmul %1, %29, %cst_24 {dimension_numbers = #tpu.dot_dimension_numbers<[1], [0], [0], [1], [0, 0, 1, 1], [], []>} : vector<16x16xf32>, vector<16x32xf32>, vector<16x32xf32> -> vector<16x32xf32>
    %31 = vector.extract_strided_slice %3 {offsets = [3, 0], sizes = [1, 32], strides = [1, 1]} : vector<6x32xf32> to vector<1x32xf32>
    %32 = vector.broadcast %31 : vector<1x32xf32> to vector<16x32xf32>
    %33 = arith.addf %30, %32 : vector<16x32xf32>
    %c1_25 = arith.constant 1 : index
    %c0_26 = arith.constant 0 : index
    %c0_27 = arith.constant 0 : index
    %34 = vector.load %arg6[%c1_25, %c0_26, %c0_27] : memref<2x16x32xf32, #tpu.memory_space<vmem>>, vector<1x16x32xf32>
    %35 = vector.shape_cast %34 : vector<1x16x32xf32> to vector<16x32xf32>
    %cst_28 = arith.constant dense<0.000000e+00> : vector<16x32xf32>
    %36 = tpu.matmul %2, %35, %cst_28 {dimension_numbers = #tpu.dot_dimension_numbers<[1], [0], [0], [1], [0, 0, 1, 1], [], []>} : vector<16x16xf32>, vector<16x32xf32>, vector<16x32xf32> -> vector<16x32xf32>
    %37 = vector.extract_strided_slice %3 {offsets = [5, 0], sizes = [1, 32], strides = [1, 1]} : vector<6x32xf32> to vector<1x32xf32>
    %38 = vector.broadcast %37 : vector<1x32xf32> to vector<16x32xf32>
    %39 = arith.addf %36, %38 : vector<16x32xf32>
    %40 = vector.extract_strided_slice %9 {offsets = [0, 0], sizes = [8, 32], strides = [1, 1]} : vector<16x32xf32> to vector<8x32xf32>
    %41 = vector.extract_strided_slice %15 {offsets = [0, 0], sizes = [8, 32], strides = [1, 1]} : vector<16x32xf32> to vector<8x32xf32>
    %42 = vector.extract_strided_slice %21 {offsets = [0, 0], sizes = [8, 32], strides = [1, 1]} : vector<16x32xf32> to vector<8x32xf32>
    %cst_29 = arith.constant dense<0.000000e+00> : vector<8x8xf32>
    %43 = tpu.matmul %40, %41, %cst_29 {dimension_numbers = #tpu.dot_dimension_numbers<[1], [1], [0], [0], [0, 0, 1, 0], [], []>} : vector<8x32xf32>, vector<8x32xf32>, vector<8x8xf32> -> vector<8x8xf32>
    %cst_30 = arith.constant dense<0xFF800000> : vector<8xf32>
    %44 = vector.multi_reduction <maximumf>, %43, %cst_30 [1] : vector<8x8xf32> to vector<8xf32>
    %45 = vector.shape_cast %44 : vector<8xf32> to vector<8x1xf32>
    %46 = vector.broadcast %45 : vector<8x1xf32> to vector<8x8xf32>
    %47 = arith.subf %43, %46 : vector<8x8xf32>
    %48 = math.exp %47 : vector<8x8xf32>
    %cst_31 = arith.constant dense<0.000000e+00> : vector<8xf32>
    %49 = vector.multi_reduction <add>, %48, %cst_31 [1] : vector<8x8xf32> to vector<8xf32>
    %50 = vector.shape_cast %49 : vector<8xf32> to vector<8x1xf32>
    %cst_32 = arith.constant dense<0.000000e+00> : vector<8x32xf32>
    %51 = tpu.matmul %48, %42, %cst_32 {dimension_numbers = #tpu.dot_dimension_numbers<[1], [0], [0], [1], [0, 0, 1, 1], [], []>} : vector<8x8xf32>, vector<8x32xf32>, vector<8x32xf32> -> vector<8x32xf32>
    %52 = vector.broadcast %50 : vector<8x1xf32> to vector<8x32xf32>
    %53 = arith.divf %51, %52 : vector<8x32xf32>
    %54 = vector.extract_strided_slice %27 {offsets = [0, 0], sizes = [8, 32], strides = [1, 1]} : vector<16x32xf32> to vector<8x32xf32>
    %55 = vector.extract_strided_slice %33 {offsets = [0, 0], sizes = [8, 32], strides = [1, 1]} : vector<16x32xf32> to vector<8x32xf32>
    %56 = vector.extract_strided_slice %39 {offsets = [0, 0], sizes = [8, 32], strides = [1, 1]} : vector<16x32xf32> to vector<8x32xf32>
    %cst_33 = arith.constant dense<0.000000e+00> : vector<8x8xf32>
    %57 = tpu.matmul %54, %55, %cst_33 {dimension_numbers = #tpu.dot_dimension_numbers<[1], [1], [0], [0], [0, 0, 1, 0], [], []>} : vector<8x32xf32>, vector<8x32xf32>, vector<8x8xf32> -> vector<8x8xf32>
    %cst_34 = arith.constant dense<0xFF800000> : vector<8xf32>
    %58 = vector.multi_reduction <maximumf>, %57, %cst_34 [1] : vector<8x8xf32> to vector<8xf32>
    %59 = vector.shape_cast %58 : vector<8xf32> to vector<8x1xf32>
    %60 = vector.broadcast %59 : vector<8x1xf32> to vector<8x8xf32>
    %61 = arith.subf %57, %60 : vector<8x8xf32>
    %62 = math.exp %61 : vector<8x8xf32>
    %cst_35 = arith.constant dense<0.000000e+00> : vector<8xf32>
    %63 = vector.multi_reduction <add>, %62, %cst_35 [1] : vector<8x8xf32> to vector<8xf32>
    %64 = vector.shape_cast %63 : vector<8xf32> to vector<8x1xf32>
    %cst_36 = arith.constant dense<0.000000e+00> : vector<8x32xf32>
    %65 = tpu.matmul %62, %56, %cst_36 {dimension_numbers = #tpu.dot_dimension_numbers<[1], [0], [0], [1], [0, 0, 1, 1], [], []>} : vector<8x8xf32>, vector<8x32xf32>, vector<8x32xf32> -> vector<8x32xf32>
    %66 = vector.broadcast %64 : vector<8x1xf32> to vector<8x32xf32>
    %67 = arith.divf %65, %66 : vector<8x32xf32>
    %68 = tpu.concatenate %53, %67 in 1 : vector<8x32xf32>, vector<8x32xf32> -> vector<8x64xf32>
    %69 = vector.extract_strided_slice %9 {offsets = [8, 0], sizes = [8, 32], strides = [1, 1]} : vector<16x32xf32> to vector<8x32xf32>
    %70 = vector.extract_strided_slice %15 {offsets = [8, 0], sizes = [8, 32], strides = [1, 1]} : vector<16x32xf32> to vector<8x32xf32>
    %71 = vector.extract_strided_slice %21 {offsets = [8, 0], sizes = [8, 32], strides = [1, 1]} : vector<16x32xf32> to vector<8x32xf32>
    %cst_37 = arith.constant dense<0.000000e+00> : vector<8x8xf32>
    %72 = tpu.matmul %69, %70, %cst_37 {dimension_numbers = #tpu.dot_dimension_numbers<[1], [1], [0], [0], [0, 0, 1, 0], [], []>} : vector<8x32xf32>, vector<8x32xf32>, vector<8x8xf32> -> vector<8x8xf32>
    %cst_38 = arith.constant dense<0xFF800000> : vector<8xf32>
    %73 = vector.multi_reduction <maximumf>, %72, %cst_38 [1] : vector<8x8xf32> to vector<8xf32>
    %74 = vector.shape_cast %73 : vector<8xf32> to vector<8x1xf32>
    %75 = vector.broadcast %74 : vector<8x1xf32> to vector<8x8xf32>
    %76 = arith.subf %72, %75 : vector<8x8xf32>
    %77 = math.exp %76 : vector<8x8xf32>
    %cst_39 = arith.constant dense<0.000000e+00> : vector<8xf32>
    %78 = vector.multi_reduction <add>, %77, %cst_39 [1] : vector<8x8xf32> to vector<8xf32>
    %79 = vector.shape_cast %78 : vector<8xf32> to vector<8x1xf32>
    %cst_40 = arith.constant dense<0.000000e+00> : vector<8x32xf32>
    %80 = tpu.matmul %77, %71, %cst_40 {dimension_numbers = #tpu.dot_dimension_numbers<[1], [0], [0], [1], [0, 0, 1, 1], [], []>} : vector<8x8xf32>, vector<8x32xf32>, vector<8x32xf32> -> vector<8x32xf32>
    %81 = vector.broadcast %79 : vector<8x1xf32> to vector<8x32xf32>
    %82 = arith.divf %80, %81 : vector<8x32xf32>
    %83 = vector.extract_strided_slice %27 {offsets = [8, 0], sizes = [8, 32], strides = [1, 1]} : vector<16x32xf32> to vector<8x32xf32>
    %84 = vector.extract_strided_slice %33 {offsets = [8, 0], sizes = [8, 32], strides = [1, 1]} : vector<16x32xf32> to vector<8x32xf32>
    %85 = vector.extract_strided_slice %39 {offsets = [8, 0], sizes = [8, 32], strides = [1, 1]} : vector<16x32xf32> to vector<8x32xf32>
    %cst_41 = arith.constant dense<0.000000e+00> : vector<8x8xf32>
    %86 = tpu.matmul %83, %84, %cst_41 {dimension_numbers = #tpu.dot_dimension_numbers<[1], [1], [0], [0], [0, 0, 1, 0], [], []>} : vector<8x32xf32>, vector<8x32xf32>, vector<8x8xf32> -> vector<8x8xf32>
    %cst_42 = arith.constant dense<0xFF800000> : vector<8xf32>
    %87 = vector.multi_reduction <maximumf>, %86, %cst_42 [1] : vector<8x8xf32> to vector<8xf32>
    %88 = vector.shape_cast %87 : vector<8xf32> to vector<8x1xf32>
    %89 = vector.broadcast %88 : vector<8x1xf32> to vector<8x8xf32>
    %90 = arith.subf %86, %89 : vector<8x8xf32>
    %91 = math.exp %90 : vector<8x8xf32>
    %cst_43 = arith.constant dense<0.000000e+00> : vector<8xf32>
    %92 = vector.multi_reduction <add>, %91, %cst_43 [1] : vector<8x8xf32> to vector<8xf32>
    %93 = vector.shape_cast %92 : vector<8xf32> to vector<8x1xf32>
    %cst_44 = arith.constant dense<0.000000e+00> : vector<8x32xf32>
    %94 = tpu.matmul %91, %85, %cst_44 {dimension_numbers = #tpu.dot_dimension_numbers<[1], [0], [0], [1], [0, 0, 1, 1], [], []>} : vector<8x8xf32>, vector<8x32xf32>, vector<8x32xf32> -> vector<8x32xf32>
    %95 = vector.broadcast %93 : vector<8x1xf32> to vector<8x32xf32>
    %96 = arith.divf %94, %95 : vector<8x32xf32>
    %97 = tpu.concatenate %82, %96 in 1 : vector<8x32xf32>, vector<8x32xf32> -> vector<8x64xf32>
    %98 = tpu.concatenate %68, %97 in 0 : vector<8x64xf32>, vector<8x64xf32> -> vector<16x64xf32>
    %c0_45 = arith.constant 0 : index
    %c0_46 = arith.constant 0 : index
    %99 = vector.load %arg8[%c0_45, %c0_46] : memref<16x64xf32, #tpu.memory_space<vmem>>, vector<16x64xf32>
    tpu.vector_store %arg8[%c0_45, %c0_46], %98 {strides = array<i32>} : memref<16x64xf32, #tpu.memory_space<vmem>>, vector<16x64xf32>,
    return
  }
  func.func @transform_0(%arg0: i32) -> (i32, i32) {
    %c0_i32 = arith.constant 0 : i32
    %c0_i32_0 = arith.constant 0 : i32
    return %arg0, %c0_i32 : i32, i32
  }
  func.func @transform_1(%arg0: i32) -> (i32, i32) {
    %c0_i32 = arith.constant 0 : i32
    %c0_i32_0 = arith.constant 0 : i32
    return %arg0, %c0_i32 : i32, i32
  }
  func.func @transform_2(%arg0: i32) -> (i32, i32) {
    %c0_i32 = arith.constant 0 : i32
    %c0_i32_0 = arith.constant 0 : i32
    return %arg0, %c0_i32 : i32, i32
  }
  func.func @transform_3(%arg0: i32) -> (i32, i32, i32) {
    %c0_i32 = arith.constant 0 : i32
    %c0_i32_0 = arith.constant 0 : i32
    %c0_i32_1 = arith.constant 0 : i32
    %c0_i32_2 = arith.constant 0 : i32
    return %c0_i32, %c0_i32_0, %c0_i32_1 : i32, i32, i32
  }
  func.func @transform_4(%arg0: i32) -> (i32, i32, i32) {
    %c0_i32 = arith.constant 0 : i32
    %c0_i32_0 = arith.constant 0 : i32
    %c0_i32_1 = arith.constant 0 : i32
    %c0_i32_2 = arith.constant 0 : i32
    return %c0_i32, %c0_i32_0, %c0_i32_1 : i32, i32, i32
  }
  func.func @transform_5(%arg0: i32) -> (i32, i32, i32) {
    %c0_i32 = arith.constant 0 : i32
    %c0_i32_0 = arith.constant 0 : i32
    %c0_i32_1 = arith.constant 0 : i32
    %c0_i32_2 = arith.constant 0 : i32
    return %c0_i32, %c0_i32_0, %c0_i32_1 : i32, i32, i32
  }
  func.func @transform_6(%arg0: i32) -> (i32, i32) {
    %c0_i32 = arith.constant 0 : i32
    %c0_i32_0 = arith.constant 0 : i32
    %c0_i32_1 = arith.constant 0 : i32
    return %c0_i32, %c0_i32_0 : i32, i32
  }
  func.func @transform_7(%arg0: i32) -> (i32, i32) {
    %c0_i32 = arith.constant 0 : i32
    %c0_i32_0 = arith.constant 0 : i32
    return %arg0, %c0_i32 : i32, i32
  }
}

</mosaic_0001>

<llo_original>
// kernel: naive_mhsa_pallas.1
$region0: #{naive_mhsa_pallas.1}
  #allocation0 [shape = 'u32[]', space=smem, size = 0x4, offset = 0x4, fixed_abs, tag = 'smem constant byte address 0x4 - core index']
  #allocation1 [shape = 'u32[72,128]{1,0:T(1,128)}', space=vmem, size = 0x9000, scoped, tag = 'internal scratch']
  %s0 = inlined_call_operand.hbm [shape: f32[16,16], index: 0, kind: input, shape index: {}]
  %s1 = inlined_call_operand.hbm [shape: f32[16,16], index: 1, kind: input, shape index: {}]
  %s2 = inlined_call_operand.hbm [shape: f32[16,16], index: 2, kind: input, shape index: {}]
  %s3 = inlined_call_operand.hbm [shape: f32[2,16,32], index: 3, kind: input, shape index: {}]
  %s4 = inlined_call_operand.hbm [shape: f32[2,16,32], index: 4, kind: input, shape index: {}]
  %s5 = inlined_call_operand.hbm [shape: f32[2,16,32], index: 5, kind: input, shape index: {}]
  %s6 = inlined_call_operand.hbm [shape: f32[6,32], index: 6, kind: input, shape index: {}]
  %s7 = inlined_call_operand.hbm [shape: f32[16,64], index: 7, kind: output, shape index: {}]
  %s8 = sld [smem:[#allocation0]]
  $region66: #{naive_mhsa_pallas.1} parent=0
    _
  %s10 = ssub.s32 1, %s8
  %s11 = scalar_select 0, %s10, %s8
  $region1: #{naive_mhsa_pallas.1} parent=0
    #allocation2 [shape = 'u8[8192]{0}', space=vmem, size = 0x2000, scoped, tag = 'input window, operand 0, single buffered']
    #allocation3 [shape = 's32[1]{0}', space=sflag, size = 0x4, scoped, tag = 'scoped memory for naive_mhsa_pallas.1']
    #allocation4 [shape = 's32[1]{0}', space=sflag, size = 0x4, scoped, tag = 'scoped memory for naive_mhsa_pallas.1']
    #allocation5 [shape = 'u8[8192]{0}', space=vmem, size = 0x2000, scoped, tag = 'input window, operand 1, single buffered']
    #allocation6 [shape = 's32[1]{0}', space=sflag, size = 0x4, scoped, tag = 'scoped memory for naive_mhsa_pallas.1']
    #allocation7 [shape = 'u8[8192]{0}', space=vmem, size = 0x2000, scoped, tag = 'input window, operand 2, single buffered']
    #allocation8 [shape = 'u8[16384]{0}', space=vmem, size = 0x4000, scoped, tag = 'input window, operand 3, single buffered']
    #allocation9 [shape = 's32[1]{0}', space=sflag, size = 0x4, scoped, tag = 'scoped memory for naive_mhsa_pallas.1']
    #allocation10 [shape = 'u8[16384]{0}', space=vmem, size = 0x4000, scoped, tag = 'input window, operand 4, single buffered']
    #allocation11 [shape = 'u8[16384]{0}', space=vmem, size = 0x4000, scoped, tag = 'input window, operand 5, single buffered']
    #allocation12 [shape = 's32[1]{0}', space=sflag, size = 0x4, scoped, tag = 'scoped memory for naive_mhsa_pallas.1']
    #allocation13 [shape = 'u8[4096]{0}', space=vmem, size = 0x1000, scoped, tag = 'input window, operand 6, single buffered']
    #allocation14 [shape = 'u8[8192]{0}', space=vmem, size = 0x2000, scoped, tag = 'output window, operand 0, single buffered']
    %12 = vsyncpa [#allocation3], 0
    %13 = vsyncpa [#allocation6], 0
    %14 = vsyncpa [#allocation9], 0
    %15 = vsyncpa [#allocation12], 0
    %16 = vsyncpa [#allocation4], 0
    // Predicated region
    $region2: #{naive_mhsa_pallas.1} parent=1 // pred_check
      _
    $region3: #{naive_mhsa_pallas.1} parent=1 // pred_check_branch
      %18 = sbr.rel (0) target = $region5
    $region4: #{naive_mhsa_pallas.1} parent=1 // pred_region
      %20 = vsyncadd [#allocation3], 0
      %s21 = sshll.u32 %s0, 4
      %s22 = int_to_ptr.hbm [resolvable:$true] %s21
      %s23 = sshll.u32 [#allocation2], 4
      %s24 = int_to_ptr.vmem [resolvable:$true] %s23
      %29 = dma.hbm_to_vmem [thread:$0]  %s22, 256, %s24, [#allocation3], 128, 128, 8
    $region5: #{naive_mhsa_pallas.1} parent=1 // pred_fallthru
      _
    // Predicated region
    $region6: #{naive_mhsa_pallas.1} parent=1 // pred_check
      _
    $region7: #{naive_mhsa_pallas.1} parent=1 // pred_check_branch
      %31 = sbr.rel (0) target = $region9
    $region8: #{naive_mhsa_pallas.1} parent=1 // pred_region
      %33 = vsyncadd [#allocation6], 0
      %s34 = sshll.u32 %s1, 4
      %s35 = int_to_ptr.hbm [resolvable:$true] %s34
      %s36 = sshll.u32 [#allocation5], 4
      %s37 = int_to_ptr.vmem [resolvable:$true] %s36
      %42 = dma.hbm_to_vmem [thread:$0]  %s35, 256, %s37, [#allocation6], 128, 128, 8
    $region9: #{naive_mhsa_pallas.1} parent=1 // pred_fallthru
      _
    // Predicated region
    $region10: #{naive_mhsa_pallas.1} parent=1 // pred_check
      _
    $region11: #{naive_mhsa_pallas.1} parent=1 // pred_check_branch
      %44 = sbr.rel (0) target = $region13
    $region12: #{naive_mhsa_pallas.1} parent=1 // pred_region
      %46 = vsyncadd [#allocation6], 0
      %s47 = sshll.u32 %s2, 4
      %s48 = int_to_ptr.hbm [resolvable:$true] %s47
      %s49 = sshll.u32 [#allocation7], 4
      %s50 = int_to_ptr.vmem [resolvable:$true] %s49
      %55 = dma.hbm_to_vmem [thread:$0]  %s48, 256, %s50, [#allocation6], 128, 128, 8
    $region13: #{naive_mhsa_pallas.1} parent=1 // pred_fallthru
      _
    // Predicated region
    $region14: #{naive_mhsa_pallas.1} parent=1 // pred_check
      _
    $region15: #{naive_mhsa_pallas.1} parent=1 // pred_check_branch
      %57 = sbr.rel (0) target = $region17
    $region16: #{naive_mhsa_pallas.1} parent=1 // pred_region
      %59 = vsyncadd [#allocation9], 0
      %s60 = sshll.u32 %s3, 4
      %s61 = int_to_ptr.hbm [resolvable:$true] %s60
      %s62 = sshll.u32 [#allocation8], 4
      %s63 = int_to_ptr.vmem [resolvable:$true] %s62
      %68 = dma.hbm_to_vmem [thread:$0]  %s61, 512, %s63, [#allocation9], 128, 128, 8
    $region17: #{naive_mhsa_pallas.1} parent=1 // pred_fallthru
      _
    // Predicated region
    $region18: #{naive_mhsa_pallas.1} parent=1 // pred_check
      _
    $region19: #{naive_mhsa_pallas.1} parent=1 // pred_check_branch
      %70 = sbr.rel (0) target = $region21
    $region20: #{naive_mhsa_pallas.1} parent=1 // pred_region
      %72 = vsyncadd [#allocation9], 0
      %s73 = sshll.u32 %s4, 4
      %s74 = int_to_ptr.hbm [resolvable:$true] %s73
      %s75 = sshll.u32 [#allocation10], 4
      %s76 = int_to_ptr.vmem [resolvable:$true] %s75
      %81 = dma.hbm_to_vmem [thread:$0]  %s74, 512, %s76, [#allocation9], 128, 128, 8
    $region21: #{naive_mhsa_pallas.1} parent=1 // pred_fallthru
      _
    // Predicated region
    $region22: #{naive_mhsa_pallas.1} parent=1 // pred_check
      _
    $region23: #{naive_mhsa_pallas.1} parent=1 // pred_check_branch
      %83 = sbr.rel (0) target = $region25
    $region24: #{naive_mhsa_pallas.1} parent=1 // pred_region
      %85 = vsyncadd [#allocation12], 0
      %s86 = sshll.u32 %s5, 4
      %s87 = int_to_ptr.hbm [resolvable:$true] %s86
      %s88 = sshll.u32 [#allocation11], 4
      %s89 = int_to_ptr.vmem [resolvable:$true] %s88
      %94 = dma.hbm_to_vmem [thread:$0]  %s87, 512, %s89, [#allocation12], 128, 128, 8
    $region25: #{naive_mhsa_pallas.1} parent=1 // pred_fallthru
      _
    // Predicated region
    $region26: #{naive_mhsa_pallas.1} parent=1 // pred_check
      _
    $region27: #{naive_mhsa_pallas.1} parent=1 // pred_check_branch
      %96 = sbr.rel (0) target = $region29
    $region28: #{naive_mhsa_pallas.1} parent=1 // pred_region
      %98 = vsyncadd [#allocation12], 0
      %s100 = sshll.u32 %s6, 4
      %s101 = int_to_ptr.hbm [resolvable:$true] %s100
      %s102 = sshll.u32 [#allocation13], 4
      %s103 = int_to_ptr.vmem [resolvable:$true] %s102
      %105 = dma.hbm_to_vmem [thread:$0]  %s101, 128, %s103, [#allocation12]
    $region29: #{naive_mhsa_pallas.1} parent=1 // pred_fallthru
      _
    // Predicated region
    $region30: #{naive_mhsa_pallas.1} parent=1 // pred_check
      _
    $region31: #{naive_mhsa_pallas.1} parent=1 // pred_check_branch
      %107 = sbr.rel (0) target = $region33
    $region32: #{naive_mhsa_pallas.1} parent=1 // pred_region
      %109 = dma.done [#allocation3], 256
    $region33: #{naive_mhsa_pallas.1} parent=1 // pred_fallthru
      _
    // Predicated region
    $region34: #{naive_mhsa_pallas.1} parent=1 // pred_check
      _
    $region35: #{naive_mhsa_pallas.1} parent=1 // pred_check_branch
      %111 = sbr.rel (0) target = $region37
    $region36: #{naive_mhsa_pallas.1} parent=1 // pred_region
      %113 = dma.done [#allocation6], 256
    $region37: #{naive_mhsa_pallas.1} parent=1 // pred_fallthru
      _
    // Predicated region
    $region38: #{naive_mhsa_pallas.1} parent=1 // pred_check
      _
    $region39: #{naive_mhsa_pallas.1} parent=1 // pred_check_branch
      %115 = sbr.rel (0) target = $region41
    $region40: #{naive_mhsa_pallas.1} parent=1 // pred_region
      %117 = dma.done [#allocation6], 256
    $region41: #{naive_mhsa_pallas.1} parent=1 // pred_fallthru
      _
    // Predicated region
    $region42: #{naive_mhsa_pallas.1} parent=1 // pred_check
      _
    $region43: #{naive_mhsa_pallas.1} parent=1 // pred_check_branch
      %119 = sbr.rel (0) target = $region45
    $region44: #{naive_mhsa_pallas.1} parent=1 // pred_region
      %121 = dma.done [#allocation9], 512
    $region45: #{naive_mhsa_pallas.1} parent=1 // pred_fallthru
      _
    // Predicated region
    $region46: #{naive_mhsa_pallas.1} parent=1 // pred_check
      _
    $region47: #{naive_mhsa_pallas.1} parent=1 // pred_check_branch
      %123 = sbr.rel (0) target = $region49
    $region48: #{naive_mhsa_pallas.1} parent=1 // pred_region
      %125 = dma.done [#allocation9], 512
    $region49: #{naive_mhsa_pallas.1} parent=1 // pred_fallthru
      _
    // Predicated region
    $region50: #{naive_mhsa_pallas.1} parent=1 // pred_check
      _
    $region51: #{naive_mhsa_pallas.1} parent=1 // pred_check_branch
      %127 = sbr.rel (0) target = $region53
    $region52: #{naive_mhsa_pallas.1} parent=1 // pred_region
      %129 = dma.done [#allocation12], 512
    $region53: #{naive_mhsa_pallas.1} parent=1 // pred_fallthru
      _
    // Predicated region
    $region54: #{naive_mhsa_pallas.1} parent=1 // pred_check
      _
    $region55: #{naive_mhsa_pallas.1} parent=1 // pred_check_branch
      %131 = sbr.rel (0) target = $region57
    $region56: #{naive_mhsa_pallas.1} parent=1 // pred_region
      %133 = dma.done [#allocation12], 128
    $region57: #{naive_mhsa_pallas.1} parent=1 // pred_fallthru
      _
    %v134 = vld [vmem:[#allocation2] sm:$0xff]
    %v135 = vld [vmem:[#allocation2 + $0x8] sm:$0xff]
    %v136 = vld [vmem:[#allocation5] sm:$0xff]
    %v137 = vld [vmem:[#allocation5 + $0x8] sm:$0xff]
    %v138 = vld [vmem:[#allocation7] sm:$0xff]
    %v139 = vld [vmem:[#allocation7 + $0x8] sm:$0xff]
    %v140 = vld [vmem:[#allocation13] sm:$0x3f]
    %v141 = vld [vmem:[#allocation8] sm:$0xff]
    %v142 = vld [vmem:[#allocation8 + $0x8] sm:$0xff]
    %v143 = vperm.slane %v140, 0
    %vm144 = vcmask 130048
    %v146 = vsel %vm144, %v134, 0
    %v149 = vsel %vm144, %v135, 0
    %151 = vmatpush.msra.mxu0 0.0
    %152 = vmatpush.msra.mxu0 0.0
    %153 = vmatpush.msra.mxu0 0.0
    %154 = vmatpush.msra.mxu0 0.0
    %155 = vmatpush.msra.mxu0 0.0
    %156 = vmatpush.msra.mxu0 0.0
    %157 = vmatpush.msra.mxu0 0.0
    %158 = vmatpush.msra.mxu0 0.0
    %159 = vmatpush.msra.mxu0 0.0
    %160 = vmatpush.msra.mxu0 0.0
    %161 = vmatpush.msra.mxu0 0.0
    %162 = vmatpush.msra.mxu0 0.0
    %163 = vmatpush.msra.mxu0 0.0
    %164 = vmatpush.msra.mxu0 0.0
    %165 = vmatpush.msra.mxu0 %v142
    %166 = vmatpush.msra.mxu0 %v141
    %167 = vmatmul.f32.gmra.mxu0 %v146
    %v168 = vpop.f32.mrf.mxu0
    %v169 = vadd.f32 %v143, %v168
    %170 = vmatmul.f32.gmra.mxu0 %v149
    %v171 = vpop.f32.mrf.mxu0
    %v172 = vadd.f32 %v143, %v171
    %173 = vdwg.mxu0
    %v174 = vld [vmem:[#allocation10] sm:$0xff]
    %v175 = vld [vmem:[#allocation10 + $0x8] sm:$0xff]
    %v176 = vperm.slane %v140, 2
    %v178 = vsel %vm144, %v136, 0
    %v181 = vsel %vm144, %v137, 0
    %183 = vmatpush.msra.mxu0 0.0
    %184 = vmatpush.msra.mxu0 0.0
    %185 = vmatpush.msra.mxu0 0.0
    %186 = vmatpush.msra.mxu0 0.0
    %187 = vmatpush.msra.mxu0 0.0
    %188 = vmatpush.msra.mxu0 0.0
    %189 = vmatpush.msra.mxu0 0.0
    %190 = vmatpush.msra.mxu0 0.0
    %191 = vmatpush.msra.mxu0 0.0
    %192 = vmatpush.msra.mxu0 0.0
    %193 = vmatpush.msra.mxu0 0.0
    %194 = vmatpush.msra.mxu0 0.0
    %195 = vmatpush.msra.mxu0 0.0
    %196 = vmatpush.msra.mxu0 0.0
    %197 = vmatpush.msra.mxu0 %v175
    %198 = vmatpush.msra.mxu0 %v174
    %199 = vmatmul.f32.gmra.mxu0 %v178
    %v200 = vpop.f32.mrf.mxu0
    %v201 = vadd.f32 %v176, %v200
    %202 = vmatmul.f32.gmra.mxu0 %v181
    %v203 = vpop.f32.mrf.mxu0
    %v204 = vadd.f32 %v176, %v203
    %205 = vdwg.mxu0
    %v206 = vld [vmem:[#allocation11] sm:$0xff]
    %v207 = vld [vmem:[#allocation11 + $0x8] sm:$0xff]
    %v208 = vperm.slane %v140, 4
    %v210 = vsel %vm144, %v138, 0
    %v213 = vsel %vm144, %v139, 0
    %215 = vmatpush.msra.mxu0 0.0
    %216 = vmatpush.msra.mxu0 0.0
    %217 = vmatpush.msra.mxu0 0.0
    %218 = vmatpush.msra.mxu0 0.0
    %219 = vmatpush.msra.mxu0 0.0
    %220 = vmatpush.msra.mxu0 0.0
    %221 = vmatpush.msra.mxu0 0.0
    %222 = vmatpush.msra.mxu0 0.0
    %223 = vmatpush.msra.mxu0 0.0
    %224 = vmatpush.msra.mxu0 0.0
    %225 = vmatpush.msra.mxu0 0.0
    %226 = vmatpush.msra.mxu0 0.0
    %227 = vmatpush.msra.mxu0 0.0
    %228 = vmatpush.msra.mxu0 0.0
    %229 = vmatpush.msra.mxu0 %v207
    %230 = vmatpush.msra.mxu0 %v206
    %231 = vmatmul.f32.gmra.mxu0 %v210
    %v232 = vpop.f32.mrf.mxu0
    %v233 = vadd.f32 %v208, %v232
    %234 = vmatmul.f32.gmra.mxu0 %v213
    %v235 = vpop.f32.mrf.mxu0
    %v236 = vadd.f32 %v208, %v235
    %237 = vdwg.mxu0
    %s238 = scalar_lea.vmem [#allocation8], 16
    %v239 = vld [vmem:[%s238] sm:$0xff]
    %v240 = vld [vmem:[%s238 + $0x8] sm:$0xff]
    %v241 = vperm.slane %v140, 1
    %242 = vmatpush.msra.mxu0 0.0
    %243 = vmatpush.msra.mxu0 0.0
    %244 = vmatpush.msra.mxu0 0.0
    %245 = vmatpush.msra.mxu0 0.0
    %246 = vmatpush.msra.mxu0 0.0
    %247 = vmatpush.msra.mxu0 0.0
    %248 = vmatpush.msra.mxu0 0.0
    %249 = vmatpush.msra.mxu0 0.0
    %250 = vmatpush.msra.mxu0 0.0
    %251 = vmatpush.msra.mxu0 0.0
    %252 = vmatpush.msra.mxu0 0.0
    %253 = vmatpush.msra.mxu0 0.0
    %254 = vmatpush.msra.mxu0 0.0
    %255 = vmatpush.msra.mxu0 0.0
    %256 = vmatpush.msra.mxu0 %v240
    %257 = vmatpush.msra.mxu0 %v239
    %258 = vmatmul.f32.gmra.mxu0 %v146
    %v259 = vpop.f32.mrf.mxu0
    %v260 = vadd.f32 %v241, %v259
    %261 = vmatmul.f32.gmra.mxu0 %v149
    %v262 = vpop.f32.mrf.mxu0
    %v263 = vadd.f32 %v241, %v262
    %264 = vdwg.mxu0
    %s265 = scalar_lea.vmem [#allocation10], 16
    %v266 = vld [vmem:[%s265] sm:$0xff]
    %v267 = vld [vmem:[%s265 + $0x8] sm:$0xff]
    %v268 = vperm.slane %v140, 3
    %269 = vmatpush.msra.mxu0 0.0
    %270 = vmatpush.msra.mxu0 0.0
    %271 = vmatpush.msra.mxu0 0.0
    %272 = vmatpush.msra.mxu0 0.0
    %273 = vmatpush.msra.mxu0 0.0
    %274 = vmatpush.msra.mxu0 0.0
    %275 = vmatpush.msra.mxu0 0.0
    %276 = vmatpush.msra.mxu0 0.0
    %277 = vmatpush.msra.mxu0 0.0
    %278 = vmatpush.msra.mxu0 0.0
    %279 = vmatpush.msra.mxu0 0.0
    %280 = vmatpush.msra.mxu0 0.0
    %281 = vmatpush.msra.mxu0 0.0
    %282 = vmatpush.msra.mxu0 0.0
    %283 = vmatpush.msra.mxu0 %v267
    %284 = vmatpush.msra.mxu0 %v266
    %285 = vmatmul.f32.gmra.mxu0 %v178
    %v286 = vpop.f32.mrf.mxu0
    %v287 = vadd.f32 %v268, %v286
    %288 = vmatmul.f32.gmra.mxu0 %v181
    %v289 = vpop.f32.mrf.mxu0
    %v290 = vadd.f32 %v268, %v289
    %291 = vdwg.mxu0
    %s292 = scalar_lea.vmem [#allocation11], 16
    %v293 = vld [vmem:[%s292] sm:$0xff]
    %v294 = vld [vmem:[%s292 + $0x8] sm:$0xff]
    %v295 = vperm.slane %v140, 5
    %296 = vmatpush.msra.mxu0 0.0
    %297 = vmatpush.msra.mxu0 0.0
    %298 = vmatpush.msra.mxu0 0.0
    %299 = vmatpush.msra.mxu0 0.0
    %300 = vmatpush.msra.mxu0 0.0
    %301 = vmatpush.msra.mxu0 0.0
    %302 = vmatpush.msra.mxu0 0.0
    %303 = vmatpush.msra.mxu0 0.0
    %304 = vmatpush.msra.mxu0 0.0
    %305 = vmatpush.msra.mxu0 0.0
    %306 = vmatpush.msra.mxu0 0.0
    %307 = vmatpush.msra.mxu0 0.0
    %308 = vmatpush.msra.mxu0 0.0
    %309 = vmatpush.msra.mxu0 0.0
    %310 = vmatpush.msra.mxu0 %v294
    %311 = vmatpush.msra.mxu0 %v293
    %312 = vmatmul.f32.gmra.mxu0 %v210
    %v313 = vpop.f32.mrf.mxu0
    %v314 = vadd.f32 %v295, %v313
    %315 = vmatmul.f32.gmra.mxu0 %v213
    %v316 = vpop.f32.mrf.mxu0
    %v317 = vadd.f32 %v295, %v316
    %318 = vdwg.mxu0
    %vm319 = vcmask 261120
    %v321 = vsel %vm319, %v169, 0
    %v324 = vsel %vm319, %v201, 0
    %326 = vmatpush.xpose.msra.mxu0 0.0
    %327 = vmatpush.xpose.msra.mxu0 0.0
    %328 = vmatpush.xpose.msra.mxu0 0.0
    %329 = vmatpush.xpose.msra.mxu0 0.0
    %330 = vmatpush.xpose.msra.mxu0 0.0
    %331 = vmatpush.xpose.msra.mxu0 0.0
    %332 = vmatpush.xpose.msra.mxu0 0.0
    %333 = vmatpush.xpose.msra.mxu0 0.0
    %334 = vmatpush.xpose.msra.mxu0 0.0
    %335 = vmatpush.xpose.msra.mxu0 0.0
    %336 = vmatpush.xpose.msra.mxu0 0.0
    %337 = vmatpush.xpose.msra.mxu0 0.0
    %338 = vmatpush.xpose.msra.mxu0 0.0
    %339 = vmatpush.xpose.msra.mxu0 0.0
    %340 = vmatpush.xpose.msra.mxu0 0.0
    %341 = vmatpush.xpose.msra.mxu0 %v324
    %342 = vmatmul.f32.gmra.mxu0 %v321
    %v343 = vpop.f32.mrf.mxu0
    %v344 = vadd.f32 0.0, %v343
    %345 = vdwg.mxu0
    %vm346 = vcmask 64512
    %v347 = vsel %vm346, %v344, -inf
    %348 = vmax.xlane.f32.xlu0 %v347
    %v349 = vpop.xlane.xlu0 %348
    %v350 = vsub.f32 %v344, %v349
    %v351 = vmul.f32 %v350, 1.442695
    %v352 = vpow.pop %v351
    %v353 = vsel %vm346, %v352, 0.0
    %354 = vadd.xlane.f32.xlu0 %v353
    %v355 = vpop.xlane.xlu0 %354
    %v357 = vsel %vm346, %v352, 0
    %359 = vmatpush.msra.mxu0 0.0
    %360 = vmatpush.msra.mxu0 0.0
    %361 = vmatpush.msra.mxu0 0.0
    %362 = vmatpush.msra.mxu0 0.0
    %363 = vmatpush.msra.mxu0 0.0
    %364 = vmatpush.msra.mxu0 0.0
    %365 = vmatpush.msra.mxu0 0.0
    %366 = vmatpush.msra.mxu0 0.0
    %367 = vmatpush.msra.mxu0 0.0
    %368 = vmatpush.msra.mxu0 0.0
    %369 = vmatpush.msra.mxu0 0.0
    %370 = vmatpush.msra.mxu0 0.0
    %371 = vmatpush.msra.mxu0 0.0
    %372 = vmatpush.msra.mxu0 0.0
    %373 = vmatpush.msra.mxu0 0.0
    %374 = vmatpush.msra.mxu0 %v233
    %375 = vmatmul.f32.gmra.mxu0 %v357
    %v376 = vpop.f32.mrf.mxu0
    %v377 = vadd.f32 0.0, %v376
    %378 = vdwg.mxu0
    %v379 = vrcp.pop %v355
    %v380 = vmul.f32 %v355, %v379
    %v381 = vsub.f32 1.0, %v380
    %v382 = vmul.f32 %v379, %v381
    %v383 = vadd.f32 %v379, %v382
    %vm384 = vweird.f32 %v355
    %vm385 = vweird.f32 %v379
    %vm386 = vmor %vm384, %vm385
    %v387 = vsel %vm386, %v379, %v383
    %v388 = vand.u32 2147483647, %v355
    %vm389 = vcmp.eq.f32.partialorder %v388, 8.507059e+37
    %v390 = vand.u32 %v355, 2147483648
    %v391 = vor.u32 1.1754944e-38, %v390
    %v392 = vsel %vm389, %v391, %v387
    %v393 = vmul.f32 %v377, %v392
    %v395 = vsel %vm319, %v260, 0
    %v398 = vsel %vm319, %v287, 0
    %400 = vmatpush.xpose.msra.mxu0 0.0
    %401 = vmatpush.xpose.msra.mxu0 0.0
    %402 = vmatpush.xpose.msra.mxu0 0.0
    %403 = vmatpush.xpose.msra.mxu0 0.0
    %404 = vmatpush.xpose.msra.mxu0 0.0
    %405 = vmatpush.xpose.msra.mxu0 0.0
    %406 = vmatpush.xpose.msra.mxu0 0.0
    %407 = vmatpush.xpose.msra.mxu0 0.0
    %408 = vmatpush.xpose.msra.mxu0 0.0
    %409 = vmatpush.xpose.msra.mxu0 0.0
    %410 = vmatpush.xpose.msra.mxu0 0.0
    %411 = vmatpush.xpose.msra.mxu0 0.0
    %412 = vmatpush.xpose.msra.mxu0 0.0
    %413 = vmatpush.xpose.msra.mxu0 0.0
    %414 = vmatpush.xpose.msra.mxu0 0.0
    %415 = vmatpush.xpose.msra.mxu0 %v398
    %416 = vmatmul.f32.gmra.mxu0 %v395
    %v417 = vpop.f32.mrf.mxu0
    %v418 = vadd.f32 0.0, %v417
    %419 = vdwg.mxu0
    %v420 = vsel %vm346, %v418, -inf
    %421 = vmax.xlane.f32.xlu0 %v420
    %v422 = vpop.xlane.xlu0 %421
    %v423 = vsub.f32 %v418, %v422
    %v424 = vmul.f32 %v423, 1.442695
    %v425 = vpow.pop %v424
    %v426 = vsel %vm346, %v425, 0.0
    %427 = vadd.xlane.f32.xlu0 %v426
    %v428 = vpop.xlane.xlu0 %427
    %v430 = vsel %vm346, %v425, 0
    %432 = vmatpush.msra.mxu0 0.0
    %433 = vmatpush.msra.mxu0 0.0
    %434 = vmatpush.msra.mxu0 0.0
    %435 = vmatpush.msra.mxu0 0.0
    %436 = vmatpush.msra.mxu0 0.0
    %437 = vmatpush.msra.mxu0 0.0
    %438 = vmatpush.msra.mxu0 0.0
    %439 = vmatpush.msra.mxu0 0.0
    %440 = vmatpush.msra.mxu0 0.0
    %441 = vmatpush.msra.mxu0 0.0
    %442 = vmatpush.msra.mxu0 0.0
    %443 = vmatpush.msra.mxu0 0.0
    %444 = vmatpush.msra.mxu0 0.0
    %445 = vmatpush.msra.mxu0 0.0
    %446 = vmatpush.msra.mxu0 0.0
    %447 = vmatpush.msra.mxu0 %v314
    %448 = vmatmul.f32.gmra.mxu0 %v430
    %v449 = vpop.f32.mrf.mxu0
    %v450 = vadd.f32 0.0, %v449
    %451 = vdwg.mxu0
    %v452 = vrcp.pop %v428
    %v453 = vmul.f32 %v428, %v452
    %v454 = vsub.f32 1.0, %v453
    %v455 = vmul.f32 %v452, %v454
    %v456 = vadd.f32 %v452, %v455
    %vm457 = vweird.f32 %v428
    %vm458 = vweird.f32 %v452
    %vm459 = vmor %vm457, %vm458
    %v460 = vsel %vm459, %v452, %v456
    %v461 = vand.u32 2147483647, %v428
    %vm462 = vcmp.eq.f32.partialorder %v461, 8.507059e+37
    %v463 = vand.u32 %v428, 2147483648
    %v464 = vor.u32 1.1754944e-38, %v463
    %v465 = vsel %vm462, %v464, %v460
    %v466 = vmul.f32 %v450, %v465
    %468 = vrot.lane.b32.xlu0 %v466, 32
    %v469 = vpop.permute.xlu0 %468
    %v471 = vsel %vm319, %v393, %v469
    %v473 = vsel %vm319, %v172, 0
    %v476 = vsel %vm319, %v204, 0
    %478 = vmatpush.xpose.msra.mxu0 0.0
    %479 = vmatpush.xpose.msra.mxu0 0.0
    %480 = vmatpush.xpose.msra.mxu0 0.0
    %481 = vmatpush.xpose.msra.mxu0 0.0
    %482 = vmatpush.xpose.msra.mxu0 0.0
    %483 = vmatpush.xpose.msra.mxu0 0.0
    %484 = vmatpush.xpose.msra.mxu0 0.0
    %485 = vmatpush.xpose.msra.mxu0 0.0
    %486 = vmatpush.xpose.msra.mxu0 0.0
    %487 = vmatpush.xpose.msra.mxu0 0.0
    %488 = vmatpush.xpose.msra.mxu0 0.0
    %489 = vmatpush.xpose.msra.mxu0 0.0
    %490 = vmatpush.xpose.msra.mxu0 0.0
    %491 = vmatpush.xpose.msra.mxu0 0.0
    %492 = vmatpush.xpose.msra.mxu0 0.0
    %493 = vmatpush.xpose.msra.mxu0 %v476
    %494 = vmatmul.f32.gmra.mxu0 %v473
    %v495 = vpop.f32.mrf.mxu0
    %v496 = vadd.f32 0.0, %v495
    %497 = vdwg.mxu0
    %v498 = vsel %vm346, %v496, -inf
    %499 = vmax.xlane.f32.xlu0 %v498
    %v500 = vpop.xlane.xlu0 %499
    %v501 = vsub.f32 %v496, %v500
    %v502 = vmul.f32 %v501, 1.442695
    %v503 = vpow.pop %v502
    %v504 = vsel %vm346, %v503, 0.0
    %505 = vadd.xlane.f32.xlu0 %v504
    %v506 = vpop.xlane.xlu0 %505
    %v508 = vsel %vm346, %v503, 0
    %510 = vmatpush.msra.mxu0 0.0
    %511 = vmatpush.msra.mxu0 0.0
    %512 = vmatpush.msra.mxu0 0.0
    %513 = vmatpush.msra.mxu0 0.0
    %514 = vmatpush.msra.mxu0 0.0
    %515 = vmatpush.msra.mxu0 0.0
    %516 = vmatpush.msra.mxu0 0.0
    %517 = vmatpush.msra.mxu0 0.0
    %518 = vmatpush.msra.mxu0 0.0
    %519 = vmatpush.msra.mxu0 0.0
    %520 = vmatpush.msra.mxu0 0.0
    %521 = vmatpush.msra.mxu0 0.0
    %522 = vmatpush.msra.mxu0 0.0
    %523 = vmatpush.msra.mxu0 0.0
    %524 = vmatpush.msra.mxu0 0.0
    %525 = vmatpush.msra.mxu0 %v236
    %526 = vmatmul.f32.gmra.mxu0 %v508
    %v527 = vpop.f32.mrf.mxu0
    %v528 = vadd.f32 0.0, %v527
    %529 = vdwg.mxu0
    %v530 = vrcp.pop %v506
    %v531 = vmul.f32 %v506, %v530
    %v532 = vsub.f32 1.0, %v531
    %v533 = vmul.f32 %v530, %v532
    %v534 = vadd.f32 %v530, %v533
    %vm535 = vweird.f32 %v506
    %vm536 = vweird.f32 %v530
    %vm537 = vmor %vm535, %vm536
    %v538 = vsel %vm537, %v530, %v534
    %v539 = vand.u32 2147483647, %v506
    %vm540 = vcmp.eq.f32.partialorder %v539, 8.507059e+37
    %v541 = vand.u32 %v506, 2147483648
    %v542 = vor.u32 1.1754944e-38, %v541
    %v543 = vsel %vm540, %v542, %v538
    %v544 = vmul.f32 %v528, %v543
    %v546 = vsel %vm319, %v263, 0
    %v549 = vsel %vm319, %v290, 0
    %551 = vmatpush.xpose.msra.mxu0 0.0
    %552 = vmatpush.xpose.msra.mxu0 0.0
    %553 = vmatpush.xpose.msra.mxu0 0.0
    %554 = vmatpush.xpose.msra.mxu0 0.0
    %555 = vmatpush.xpose.msra.mxu0 0.0
    %556 = vmatpush.xpose.msra.mxu0 0.0
    %557 = vmatpush.xpose.msra.mxu0 0.0
    %558 = vmatpush.xpose.msra.mxu0 0.0
    %559 = vmatpush.xpose.msra.mxu0 0.0
    %560 = vmatpush.xpose.msra.mxu0 0.0
    %561 = vmatpush.xpose.msra.mxu0 0.0
    %562 = vmatpush.xpose.msra.mxu0 0.0
    %563 = vmatpush.xpose.msra.mxu0 0.0
    %564 = vmatpush.xpose.msra.mxu0 0.0
    %565 = vmatpush.xpose.msra.mxu0 0.0
    %566 = vmatpush.xpose.msra.mxu0 %v549
    %567 = vmatmul.f32.gmra.mxu0 %v546
    %v568 = vpop.f32.mrf.mxu0
    %v569 = vadd.f32 0.0, %v568
    %570 = vdwg.mxu0
    %v571 = vsel %vm346, %v569, -inf
    %572 = vmax.xlane.f32.xlu0 %v571
    %v573 = vpop.xlane.xlu0 %572
    %v574 = vsub.f32 %v569, %v573
    %v575 = vmul.f32 %v574, 1.442695
    %v576 = vpow.pop %v575
    %v577 = vsel %vm346, %v576, 0.0
    %578 = vadd.xlane.f32.xlu0 %v577
    %v579 = vpop.xlane.xlu0 %578
    %v581 = vsel %vm346, %v576, 0
    %583 = vmatpush.msra.mxu0 0.0
    %584 = vmatpush.msra.mxu0 0.0
    %585 = vmatpush.msra.mxu0 0.0
    %586 = vmatpush.msra.mxu0 0.0
    %587 = vmatpush.msra.mxu0 0.0
    %588 = vmatpush.msra.mxu0 0.0
    %589 = vmatpush.msra.mxu0 0.0
    %590 = vmatpush.msra.mxu0 0.0
    %591 = vmatpush.msra.mxu0 0.0
    %592 = vmatpush.msra.mxu0 0.0
    %593 = vmatpush.msra.mxu0 0.0
    %594 = vmatpush.msra.mxu0 0.0
    %595 = vmatpush.msra.mxu0 0.0
    %596 = vmatpush.msra.mxu0 0.0
    %597 = vmatpush.msra.mxu0 0.0
    %598 = vmatpush.msra.mxu0 %v317
    %599 = vmatmul.f32.gmra.mxu0 %v581
    %v600 = vpop.f32.mrf.mxu0
    %v601 = vadd.f32 0.0, %v600
    %602 = vdwg.mxu0
    %v603 = vrcp.pop %v579
    %v604 = vmul.f32 %v579, %v603
    %v605 = vsub.f32 1.0, %v604
    %v606 = vmul.f32 %v603, %v605
    %v607 = vadd.f32 %v603, %v606
    %vm608 = vweird.f32 %v579
    %vm609 = vweird.f32 %v603
    %vm610 = vmor %vm608, %vm609
    %v611 = vsel %vm610, %v603, %v607
    %v612 = vand.u32 2147483647, %v579
    %vm613 = vcmp.eq.f32.partialorder %v612, 8.507059e+37
    %v614 = vand.u32 %v579, 2147483648
    %v615 = vor.u32 1.1754944e-38, %v614
    %v616 = vsel %vm613, %v615, %v611
    %v617 = vmul.f32 %v601, %v616
    %619 = vrot.lane.b32.xlu0 %v617, 32
    %v620 = vpop.permute.xlu0 %619
    %v622 = vsel %vm319, %v544, %v620
    %vm623 = vcmask 523264
    %624 = vst.msk [vmem:[#allocation14] sm:$0xff] %vm623, %v471
    %625 = vst.msk [vmem:[#allocation14 + $0x8] sm:$0xff] %vm623, %v622
    // Predicated region
    $region58: #{naive_mhsa_pallas.1} parent=1 // pred_check
      _
    $region59: #{naive_mhsa_pallas.1} parent=1 // pred_check_branch
      %627 = sbr.rel (0) target = $region61
    $region60: #{naive_mhsa_pallas.1} parent=1 // pred_region
      %629 = vsyncadd [#allocation4], 0
      %s630 = sshll.u32 [#allocation14], 4
      %s631 = int_to_ptr.vmem [resolvable:$true] %s630
      %s632 = sshll.u32 %s7, 4
      %s633 = int_to_ptr.hbm [resolvable:$true] %s632
      %638 = dma.vmem_to_hbm [thread:$0]  %s631, 256, %s633, [#allocation4], 128, 128, 8
    $region61: #{naive_mhsa_pallas.1} parent=1 // pred_fallthru
      _
    // Predicated region
    $region62: #{naive_mhsa_pallas.1} parent=1 // pred_check
      _
    $region63: #{naive_mhsa_pallas.1} parent=1 // pred_check_branch
      %640 = sbr.rel (0) target = $region65
    $region64: #{naive_mhsa_pallas.1} parent=1 // pred_region
      %642 = dma.done [#allocation4], 256
    $region65: #{naive_mhsa_pallas.1} parent=1 // pred_fallthru
      _
    %643 = vsyncpa [#allocation3], 1
    %644 = vsyncpa [#allocation6], 1
    %645 = vsyncpa [#allocation9], 1
    %646 = vsyncpa [#allocation12], 1
    %647 = vsyncpa [#allocation4], 1

</llo_original>
